<compile_context>
chip_gen: v5e
topology: v5e:2x2
jax: 0.10.0
libtpu: 0.0.40
codegen_flags: <defaults>
</compile_context>

<pallas_src>
import functools

import jax
import jax.numpy as jnp
from jax import lax
from jax.experimental import pallas as pl
from jax.experimental.pallas import tpu as pltpu


def _channel_attention_kernel(x_ref, w1t_ref, w2t_ref, o_ref,
                              sum_acc, max_acc, h_acc,
                              *, inv_hw, hw, thw, mask_spatial):
    # x_ref block: (bn, tc, thw) in the caller's dtype.
    # w1t_ref: (tc, C_r) tile of w1^T for this channel tile; w2t_ref: (C_r, C).
    cdx = pl.program_id(1)            # channel-tile index
    sdx = pl.program_id(2)            # spatial-tile index
    nc = pl.num_programs(1)
    ns = pl.num_programs(2)
    bn = sum_acc.shape[0]

    # ---- partial pooling over this block ---------------------------------
    x = x_ref[...]                                     # native dtype (HBM-bound)
    if mask_spatial:
        # Padded last spatial tile: mask out-of-range lanes.
        pos = sdx * thw + lax.broadcasted_iota(jnp.int32, x.shape, 2)
        valid = pos < hw
        x_max_src = jnp.where(valid, x, jnp.array(-jnp.inf, dtype=x.dtype))
        x_sum_src = jnp.where(valid, x.astype(jnp.float32), 0.0)
    else:
        x_max_src = x                                  # max exact in native dtype
        x_sum_src = x.astype(jnp.float32)              # f32 only feeds the sum

    part_sum = jnp.sum(x_sum_src, axis=-1)                      # (bn, tc) f32
    part_max = jnp.max(x_max_src, axis=-1).astype(jnp.float32)  # (bn, tc) f32

    @pl.when(jnp.logical_and(cdx == 0, sdx == 0))
    def _init_h():
        h_acc[...] = jnp.zeros_like(h_acc)

    @pl.when(sdx == 0)
    def _init_pool():
        sum_acc[...] = jnp.zeros_like(sum_acc)
        max_acc[...] = jnp.full_like(max_acc, -jnp.inf)

    sum_acc[...] = sum_acc[...] + part_sum
    max_acc[...] = jnp.maximum(max_acc[...], part_max)

    # ---- channel tile complete: fold into (fused) first MLP layer --------
    @pl.when(sdx == ns - 1)
    def _layer1():
        pooled = jnp.concatenate(
            [sum_acc[...] * inv_hw, max_acc[...]], axis=0)      # (2*bn, tc)
        h_acc[...] = h_acc[...] + jnp.dot(
            pooled, w1t_ref[...], preferred_element_type=jnp.float32)

    # ---- all channel tiles done: ReLU, layer 2 (once), sigmoid, store ----
    @pl.when(jnp.logical_and(cdx == nc - 1, sdx == ns - 1))
    def _finalize():
        h = jnp.maximum(h_acc[...], 0.0)                        # (2*bn, C_r)
        g = jnp.dot(h[:bn] + h[bn:], w2t_ref[...],
                    preferred_element_type=jnp.float32)         # (bn, C)
        o_ref[:, 0, :] = jax.nn.sigmoid(g).astype(o_ref.dtype)


def _chip_budgets():
    """Per-generation (x block budget, scoped-VMEM limit cap) in bytes."""
    vmem_cap = None
    try:
        info = pltpu.get_tpu_info()
        vmem_cap = int(getattr(info, "vmem_capacity_bytes", 0)) or None
    except Exception:
        vmem_cap = None
    if vmem_cap is None:
        vmem_cap = 64 * 1024 * 1024               # conservative (v7x per-TC)
    if vmem_cap >= 96 * 1024 * 1024:              # v5e / v6e: 128 MiB VMEM
        return 16 * 1024 * 1024, 100 * 1024 * 1024
    # v7x: 64 MiB per TC -> keep headroom for double buffering + scratch.
    return 6 * 1024 * 1024, 44 * 1024 * 1024


def _choose_tiles(n, c, hw, itemsize, budget):
    """Pick (bn, tc, thw, mask_spatial) for x blocks of shape (bn, tc, thw)."""
    per_batch = c * hw * itemsize
    if per_batch <= budget:
        # Whole (C, HW) per batch element; pack a few batches per step but keep
        # >= min(n, 8) grid steps so DMA/compute pipeline and v7x's two cores
        # both get work.
        bn = max(1, min(n, budget // per_batch, max(1, n // min(n, 8))))
        while n % bn:                              # keep the grid exact
            bn -= 1
        return int(bn), c, hw, False

    row_bytes = hw * itemsize
    if c % 8 == 0 and 8 * row_bytes <= budget:
        # Channel tiling: (1, tc, HW) = tc fully contiguous HBM rows per DMA.
        tc = 8
        for cand in range(16, c, 8):
            if c % cand == 0 and cand * row_bytes <= budget:
                tc = cand
        return 1, int(tc), hw, False

    # Rare: even a few full-HW rows exceed the budget -> also tile HW.
    tc = c if c % 8 else 8
    lane_budget = max(128, budget // max(1, tc * itemsize))
    thw = None
    cand = 128
    while cand <= min(hw, lane_budget):
        if hw % cand == 0:
            thw = cand
        cand += 128
    if thw is not None:
        return 1, int(tc), int(thw), False
    thw = max(128, (min(hw, lane_budget) // 128) * 128)
    return 1, int(tc), int(thw), True              # padded last tile, masked


def channel_attention_forward(x_nchw, w1, w2):
    """x_nchw: (N, C, H, W).  w1: (C_r, C), w2: (C, C_r) — 1x1 conv weights, no bias.
    Returns sigmoid(MLP(avgpool(x)) + MLP(maxpool(x))) of shape (N, C, 1, 1)."""
    N, C, H, W = x_nchw.shape
    HW = H * W
    C_r = w1.shape[0]

    x = x_nchw.reshape(N, C, HW)                    # caller's dtype (HBM-bound)
    w1t = jnp.transpose(w1).astype(jnp.float32)     # (C, C_r)
    w2t = jnp.transpose(w2).astype(jnp.float32)     # (C_r, C)

    block_budget, vmem_cap = _chip_budgets()
    bn, tc, thw, mask_spatial = _choose_tiles(N, C, HW, x.dtype.itemsize,
                                              block_budget)

    ns = pl.cdiv(HW, thw) if mask_spatial else HW // thw
    grid = (N // bn, C // tc, ns)

    block_bytes = bn * tc * thw * x.dtype.itemsize
    vmem_limit = int(min(vmem_cap, max(32 * 1024 * 1024, 5 * block_bytes)))

    kernel = functools.partial(
        _channel_attention_kernel,
        inv_hw=1.0 / HW, hw=HW, thw=thw, mask_spatial=mask_spatial)

    out = pl.pallas_call(
        kernel,
        out_shape=jax.ShapeDtypeStruct((N, 1, C), x.dtype),
        grid_spec=pltpu.PrefetchScalarGridSpec(
            num_scalar_prefetch=0,
            grid=grid,
            in_specs=[
                pl.BlockSpec((bn, tc, thw), lambda i, c, s: (i, c, s)),   # x
                pl.BlockSpec((tc, C_r), lambda i, c, s: (c, 0)),          # w1^T tile
                pl.BlockSpec((C_r, C), lambda i, c, s: (0, 0)),           # w2^T full
            ],
            out_specs=pl.BlockSpec((bn, 1, C), lambda i, c, s: (i, 0, 0)),
            scratch_shapes=[
                pltpu.VMEM((bn, tc), jnp.float32),        # running sum (tile)
                pltpu.VMEM((bn, tc), jnp.float32),        # running max (tile)
                pltpu.VMEM((2 * bn, C_r), jnp.float32),   # stacked layer-1 acc
            ],
        ),
        compiler_params=pltpu.CompilerParams(
            dimension_semantics=("parallel", "arbitrary", "arbitrary"),
            vmem_limit_bytes=vmem_limit,
        ),
    )(x, w1t, w2t)

    return out.reshape(N, C, 1, 1)


def channel_attention_reference(x, w1, w2):
    """Plain-JAX reference matching the PyTorch forward."""
    xf = x.astype(jnp.float32)
    avg = jnp.mean(xf, axis=(2, 3))                    # (N, C)
    mx = jnp.max(xf, axis=(2, 3))                      # (N, C)

    def mlp(v):
        h = jax.nn.relu(v @ w1.astype(jnp.float32).T)  # (N, C_r)
        return h @ w2.astype(jnp.float32).T            # (N, C)

    out = jax.nn.sigmoid(mlp(avg) + mlp(mx))           # (N, C)
    return out[:, :, None, None].astype(x.dtype)


if __name__ == "__main__":
    key = jax.random.PRNGKey(0)
    k_x, k_w1, k_w2 = jax.random.split(key, 3)

    # Small shapes: batch=2, channels=8 (ratio=4 -> hidden=2), spatial=16x16.
    N, C, H, W = 2, 8, 16, 16
    ratio = 4
    C_r = C // ratio

    x = jax.random.normal(k_x, (N, C, H, W), dtype=jnp.float32)

    # Deterministic 1x1 Conv2d (bias=False) params, PyTorch-like fan-in bound.
    bound1 = 1.0 / (C ** 0.5)
    w1 = jax.random.uniform(k_w1, (C_r, C), minval=-bound1, maxval=bound1,
                            dtype=jnp.float32)
    bound2 = 1.0 / (C_r ** 0.5)
    w2 = jax.random.uniform(k_w2, (C, C_r), minval=-bound2, maxval=bound2,
                            dtype=jnp.float32)

    out = channel_attention_forward(x, w1, w2)
    out = jax.block_until_ready(out)

    ref = channel_attention_reference(x, w1, w2)
    assert out.shape == (N, C, 1, 1)
    assert jnp.allclose(out, ref, atol=1e-5, rtol=1e-5), "mismatch vs reference"

    print("KERNEL_OK")
</pallas_src>

<mosaic_0001>
module attributes {stable_mosaic.version = 11 : i64} {
  func.func @_channel_attention_kernel(%arg0: i32, %arg1: i32, %arg2: i32, %arg3: memref<1x8x256xf32, #tpu.memory_space<vmem>>, %arg4: memref<8x2xf32, #tpu.memory_space<vmem>>, %arg5: memref<2x8xf32, #tpu.memory_space<vmem>>, %arg6: memref<1x1x8xf32, #tpu.memory_space<vmem>>, %arg7: memref<1x8xf32, #tpu.memory_space<vmem>>, %arg8: memref<1x8xf32, #tpu.memory_space<vmem>>, %arg9: memref<2x2xf32, #tpu.memory_space<vmem>>) attributes {dimension_semantics = [#tpu.dimension_semantics<parallel>, #tpu.dimension_semantics<arbitrary>, #tpu.dimension_semantics<arbitrary>], iteration_bounds = array<i64: 2, 1, 1>, scalar_prefetch = 0 : i64, scratch_operands = 3 : i64, tpu.core_type = #tpu.core_type<tc>, window_params = [{transform_indices = @transform_0, window_bounds = array<i64: 1, 8, 256>}, {transform_indices = @transform_1, window_bounds = array<i64: 8, 2>}, {pipeline_mode = #tpu.pipeline_mode<synchronous>, transform_indices = @transform_2, window_bounds = array<i64: 2, 8>}, {transform_indices = @transform_3, window_bounds = array<i64: 1, 1, 8>}]} {
    %c0 = arith.constant 0 : index
    %c0_0 = arith.constant 0 : index
    %c0_1 = arith.constant 0 : index
    %0 = vector.load %arg3[%c0, %c0_0, %c0_1] : memref<1x8x256xf32, #tpu.memory_space<vmem>>, vector<1x8x256xf32>
    %cst = arith.constant dense<0.000000e+00> : vector<1x8xf32>
    %1 = vector.multi_reduction <add>, %0, %cst [2] : vector<1x8x256xf32> to vector<1x8xf32>
    %cst_2 = arith.constant dense<0xFF800000> : vector<1x8xf32>
    %2 = vector.multi_reduction <maximumf>, %0, %cst_2 [2] : vector<1x8x256xf32> to vector<1x8xf32>
    %c0_i32 = arith.constant 0 : i32
    %3 = arith.cmpi eq, %arg1, %c0_i32 : i32
    %c0_i32_3 = arith.constant 0 : i32
    %4 = arith.cmpi eq, %arg2, %c0_i32_3 : i32
    %5 = arith.andi %3, %4 : i1
    %6 = arith.extui %5 : i1 to i32
    %c0_i32_4 = arith.constant 0 : i32
    %7 = arith.cmpi ne, %6, %c0_i32_4 : i32
    scf.if %7 {
      %cst_20 = arith.constant 0.000000e+00 : f32
      %25 = vector.broadcast %cst_20 : f32 to vector<2x2xf32>
      %c0_21 = arith.constant 0 : index
      %c0_22 = arith.constant 0 : index
      %26 = vector.load %arg9[%c0_21, %c0_22] : memref<2x2xf32, #tpu.memory_space<vmem>>, vector<2x2xf32>
      tpu.vector_store %arg9[%c0_21, %c0_22], %25 {strides = array<i32>} : memref<2x2xf32, #tpu.memory_space<vmem>>, vector<2x2xf32>,
    } else {
    }
    %c0_i32_5 = arith.constant 0 : i32
    %8 = arith.cmpi eq, %arg2, %c0_i32_5 : i32
    %9 = arith.extui %8 : i1 to i32
    %c0_i32_6 = arith.constant 0 : i32
    %10 = arith.cmpi ne, %9, %c0_i32_6 : i32
    scf.if %10 {
      %cst_20 = arith.constant 0.000000e+00 : f32
      %25 = vector.broadcast %cst_20 : f32 to vector<1x8xf32>
      %c0_21 = arith.constant 0 : index
      %c0_22 = arith.constant 0 : index
      %26 = vector.load %arg7[%c0_21, %c0_22] : memref<1x8xf32, #tpu.memory_space<vmem>>, vector<1x8xf32>
      tpu.vector_store %arg7[%c0_21, %c0_22], %25 {strides = array<i32>} : memref<1x8xf32, #tpu.memory_space<vmem>>, vector<1x8xf32>,
      %cst_23 = arith.constant 0xFF800000 : f32
      %27 = vector.broadcast %cst_23 : f32 to vector<1x8xf32>
      %c0_24 = arith.constant 0 : index
      %c0_25 = arith.constant 0 : index
      %28 = vector.load %arg8[%c0_24, %c0_25] : memref<1x8xf32, #tpu.memory_space<vmem>>, vector<1x8xf32>
      tpu.vector_store %arg8[%c0_24, %c0_25], %27 {strides = array<i32>} : memref<1x8xf32, #tpu.memory_space<vmem>>, vector<1x8xf32>,
    } else {
    }
    %c0_7 = arith.constant 0 : index
    %c0_8 = arith.constant 0 : index
    %11 = vector.load %arg7[%c0_7, %c0_8] : memref<1x8xf32, #tpu.memory_space<vmem>>, vector<1x8xf32>
    %12 = arith.addf %11, %1 : vector<1x8xf32>
    %c0_9 = arith.constant 0 : index
    %c0_10 = arith.constant 0 : index
    %13 = vector.load %arg7[%c0_9, %c0_10] : memref<1x8xf32, #tpu.memory_space<vmem>>, vector<1x8xf32>
    tpu.vector_store %arg7[%c0_9, %c0_10], %12 {strides = array<i32>} : memref<1x8xf32, #tpu.memory_space<vmem>>, vector<1x8xf32>,
    %c0_11 = arith.constant 0 : index
    %c0_12 = arith.constant 0 : index
    %14 = vector.load %arg8[%c0_11, %c0_12] : memref<1x8xf32, #tpu.memory_space<vmem>>, vector<1x8xf32>
    %15 = arith.maximumf %14, %2 : vector<1x8xf32>
    %c0_13 = arith.constant 0 : index
    %c0_14 = arith.constant 0 : index
    %16 = vector.load %arg8[%c0_13, %c0_14] : memref<1x8xf32, #tpu.memory_space<vmem>>, vector<1x8xf32>
    tpu.vector_store %arg8[%c0_13, %c0_14], %15 {strides = array<i32>} : memref<1x8xf32, #tpu.memory_space<vmem>>, vector<1x8xf32>,
    %c0_i32_15 = arith.constant 0 : i32
    %17 = arith.cmpi eq, %arg2, %c0_i32_15 : i32
    %18 = arith.extui %17 : i1 to i32
    %c0_i32_16 = arith.constant 0 : i32
    %19 = arith.cmpi ne, %18, %c0_i32_16 : i32
    scf.if %19 {
      %c0_20 = arith.constant 0 : index
      %c0_21 = arith.constant 0 : index
      %25 = vector.load %arg7[%c0_20, %c0_21] : memref<1x8xf32, #tpu.memory_space<vmem>>, vector<1x8xf32>
      %cst_22 = arith.constant 3.906250e-03 : f32
      %26 = vector.broadcast %cst_22 : f32 to vector<1x8xf32>
      %27 = arith.mulf %25, %26 : vector<1x8xf32>
      %c0_23 = arith.constant 0 : index
      %c0_24 = arith.constant 0 : index
      %28 = vector.load %arg8[%c0_23, %c0_24] : memref<1x8xf32, #tpu.memory_space<vmem>>, vector<1x8xf32>
      %29 = tpu.concatenate %27, %28 in 0 : vector<1x8xf32>, vector<1x8xf32> -> vector<2x8xf32>
      %c0_25 = arith.constant 0 : index
      %c0_26 = arith.constant 0 : index
      %30 = vector.load %arg9[%c0_25, %c0_26] : memref<2x2xf32, #tpu.memory_space<vmem>>, vector<2x2xf32>
      %c0_27 = arith.constant 0 : index
      %c0_28 = arith.constant 0 : index
      %31 = vector.load %arg4[%c0_27, %c0_28] : memref<8x2xf32, #tpu.memory_space<vmem>>, vector<8x2xf32>
      %cst_29 = arith.constant dense<0.000000e+00> : vector<2x2xf32>
      %32 = tpu.matmul %29, %31, %cst_29 {dimension_numbers = #tpu.dot_dimension_numbers<[1], [0], [0], [1], [0, 0, 1, 1], [], []>} : vector<2x8xf32>, vector<8x2xf32>, vector<2x2xf32> -> vector<2x2xf32>
      %33 = arith.addf %30, %32 : vector<2x2xf32>
      %c0_30 = arith.constant 0 : index
      %c0_31 = arith.constant 0 : index
      %34 = vector.load %arg9[%c0_30, %c0_31] : memref<2x2xf32, #tpu.memory_space<vmem>>, vector<2x2xf32>
      tpu.vector_store %arg9[%c0_30, %c0_31], %33 {strides = array<i32>} : memref<2x2xf32, #tpu.memory_space<vmem>>, vector<2x2xf32>,
    } else {
    }
    %c0_i32_17 = arith.constant 0 : i32
    %20 = arith.cmpi eq, %arg1, %c0_i32_17 : i32
    %c0_i32_18 = arith.constant 0 : i32
    %21 = arith.cmpi eq, %arg2, %c0_i32_18 : i32
    %22 = arith.andi %20, %21 : i1
    %23 = arith.extui %22 : i1 to i32
    %c0_i32_19 = arith.constant 0 : i32
    %24 = arith.cmpi ne, %23, %c0_i32_19 : i32
    scf.if %24 {
      %c0_20 = arith.constant 0 : index
      %c0_21 = arith.constant 0 : index
      %25 = vector.load %arg9[%c0_20, %c0_21] : memref<2x2xf32, #tpu.memory_space<vmem>>, vector<2x2xf32>
      %cst_22 = arith.constant 0.000000e+00 : f32
      %26 = vector.broadcast %cst_22 : f32 to vector<2x2xf32>
      %27 = arith.maximumf %25, %26 : vector<2x2xf32>
      %28 = vector.extract_strided_slice %27 {offsets = [0, 0], sizes = [1, 2], strides = [1, 1]} : vector<2x2xf32> to vector<1x2xf32>
      %29 = vector.extract_strided_slice %27 {offsets = [1, 0], sizes = [1, 2], strides = [1, 1]} : vector<2x2xf32> to vector<1x2xf32>
      %30 = arith.addf %28, %29 : vector<1x2xf32>
      %c0_23 = arith.constant 0 : index
      %c0_24 = arith.constant 0 : index
      %31 = vector.load %arg5[%c0_23, %c0_24] : memref<2x8xf32, #tpu.memory_space<vmem>>, vector<2x8xf32>
      %cst_25 = arith.constant dense<0.000000e+00> : vector<1x8xf32>
      %32 = tpu.matmul %30, %31, %cst_25 {dimension_numbers = #tpu.dot_dimension_numbers<[1], [0], [0], [1], [0, 0, 1, 1], [], []>} : vector<1x2xf32>, vector<2x8xf32>, vector<1x8xf32> -> vector<1x8xf32>
      %33 = arith.negf %32 : vector<1x8xf32>
      %34 = math.exp %33 : vector<1x8xf32>
      %cst_26 = arith.constant 1.000000e+00 : f32
      %35 = vector.broadcast %cst_26 : f32 to vector<1x8xf32>
      %36 = arith.addf %35, %34 : vector<1x8xf32>
      %37 = arith.divf %35, %36 : vector<1x8xf32>
      %c0_27 = arith.constant 0 : index
      %c0_28 = arith.constant 0 : index
      %c0_29 = arith.constant 0 : index
      %38 = vector.load %arg6[%c0_27, %c0_28, %c0_29] : memref<1x1x8xf32, #tpu.memory_space<vmem>>, vector<1x1x8xf32>
      %39 = vector.shape_cast %38 : vector<1x1x8xf32> to vector<1x8xf32>
      %40 = vector.shape_cast %37 : vector<1x8xf32> to vector<1x1x8xf32>
      tpu.vector_store %arg6[%c0_27, %c0_28, %c0_29], %40 {strides = array<i32>} : memref<1x1x8xf32, #tpu.memory_space<vmem>>, vector<1x1x8xf32>,
    } else {
    }
    return
  }
  func.func @transform_0(%arg0: i32, %arg1: i32, %arg2: i32) -> (i32, i32, i32) {
    %c0_i32 = arith.constant 0 : i32
    return %arg0, %arg1, %arg2 : i32, i32, i32
  }
  func.func @transform_1(%arg0: i32, %arg1: i32, %arg2: i32) -> (i32, i32) {
    %c0_i32 = arith.constant 0 : i32
    %c0_i32_0 = arith.constant 0 : i32
    return %arg1, %c0_i32 : i32, i32
  }
  func.func @transform_2(%arg0: i32, %arg1: i32, %arg2: i32) -> (i32, i32) {
    %c0_i32 = arith.constant 0 : i32
    %c0_i32_0 = arith.constant 0 : i32
    %c0_i32_1 = arith.constant 0 : i32
    return %c0_i32, %c0_i32_0 : i32, i32
  }
  func.func @transform_3(%arg0: i32, %arg1: i32, %arg2: i32) -> (i32, i32, i32) {
    %c0_i32 = arith.constant 0 : i32
    %c0_i32_0 = arith.constant 0 : i32
    %c0_i32_1 = arith.constant 0 : i32
    return %arg0, %c0_i32, %c0_i32_0 : i32, i32, i32
  }
}

</mosaic_0001>

<llo_original>
// kernel: tpu_custom_call.1
$region0: #{tpu_custom_call.1}
  #allocation0 [shape = 'u32[]', space=smem, size = 0x4, offset = 0x4, fixed_abs, tag = 'smem constant byte address 0x4 - core index']
  #allocation1 [shape = 'u32[72,128]{1,0:T(1,128)}', space=vmem, size = 0x9000, scoped, tag = 'internal scratch']
  #allocation2 [shape = 'f32[1,8]{1,0:T(1,128)}', space=vmem, size = 0x200, scoped, tag = 'scratch operand']
  #allocation3 [shape = 'f32[1,8]{1,0:T(1,128)}', space=vmem, size = 0x200, scoped, tag = 'scratch operand']
  #allocation4 [shape = 'f32[2,2]{1,0:T(2,128)}', space=vmem, size = 0x400, scoped, tag = 'scratch operand']
  %s0 = inlined_call_operand.hbm [shape: f32[2,8,256], index: 0, kind: input, shape index: {}]
  %s1 = inlined_call_operand.vmem [shape: f32[8,2], index: 1, kind: input, shape index: {}]
  %s2 = inlined_call_operand.vmem [shape: f32[2,8], index: 2, kind: input, shape index: {}]
  %s3 = inlined_call_operand.hbm [shape: f32[2,1,8], index: 3, kind: output, shape index: {}]
  %s4 = sld [smem:[#allocation0]]
  $region65: #{tpu_custom_call.1} parent=0
    _
  %s6 = ssub.s32 1, %s4
  %s7 = scalar_select 0, %s6, %s4
  $region1: #{tpu_custom_call.1} parent=0
    #allocation5 [shape = 'u8[16384]{0}', space=vmem, size = 0x4000, scoped, tag = 'input window, operand 0']
    #allocation6 [shape = 's32[2]{0}', space=sflag, size = 0x8, scoped, tag = 'scoped memory for tpu_custom_call.1']
    #allocation7 [shape = 's32[2]{0}', space=sflag, size = 0x8, scoped, tag = 'scoped memory for tpu_custom_call.1']
    #allocation8 [shape = 'u8[1024]{0}', space=vmem, size = 0x400, scoped, tag = 'output window, operand 0']
    %8 = vsyncpa [#allocation6], 0
    %s9 = scalar_lea.sflag [#allocation6], 1
    %10 = vsyncpa %s9, 0
    %11 = vsyncpa [#allocation7], 0
    %s12 = scalar_lea.sflag [#allocation7], 1
    %13 = vsyncpa %s12, 0
    loop: start=0, step=1, limit=4
    $region2: #{tpu_custom_call.1} parent=1 // loop_pre_header
      _
    $region3: #{tpu_custom_call.1} parent=1 // loop_header
      %s15 = sphi 0, %s19
      %p16 = scmp.ge.s32.totalorder %s15, 4
      %s22 = sphi 0, %s41
      %s23 = sphi 0, %s37
      %s24 = sphi 0, %s33
      %s25 = sphi 0, %s22
      %s26 = sphi 0, %s23
      %s27 = sphi 0, %s24
      %s28 = sphi 0, %s25
      %s29 = sphi 0, %s26
      %s30 = sphi 0, %s27
      %s48 = sphi 0, %s50
      %s51 = sphi 0, %s48
      %s52 = sphi 0, %s51
      %s68 = sphi 0, %s52
      %s74 = sphi 0, %s76
      %s77 = sphi 0, %s74
      %s78 = sphi 0, %s77
      %s94 = sphi 0, %s78
      %s98 = sphi 0, %s98
      %s100 = sphi 0, %s98
      %s101 = sphi 0, %s100
      %s115 = sphi 0, %s101
      %s121 = sphi 0, %s123
      %s124 = sphi 0, %s121
      %s125 = sphi 0, %s124
      %s141 = sphi 0, %s125
    $region4: #{tpu_custom_call.1} parent=1 // loop_header_branch
      %18 = sbr.rel (%p16) target = $region8
    $region5: #{tpu_custom_call.1} parent=1 // loop_body
      %s20 = ssub.s32 %s15, 1
      %s21 = ssub.s32 %s15, 2
      %s31 = sadd.s32 1, %s24
      %p32 = scmp.ge.s32.totalorder %s31, 1
      %s33 = scalar_select %p32, 0, %s31
      %s34 = sadd.s32 1, %s23
      %s35 = scalar_select %p32, %s34, %s23
      %p36 = scmp.ge.s32.totalorder %s35, 1
      %s37 = scalar_select %p36, 0, %s35
      %s38 = sadd.s32 1, %s22
      %s39 = scalar_select %p36, %s38, %s22
      %p40 = scmp.ge.s32.totalorder %s39, 2
      %s41 = scalar_select %p40, 0, %s39
      %s42 = ssub.s32 %s22, %s41
      %s43 = ssub.s32 %s23, %s37
      %s44 = sor.u32 %s42, %s43
      %s45 = ssub.s32 %s24, %s33
      %s46 = sor.u32 %s44, %s45
      %p47 = scmp.eq.s32.totalorder %s46, 0
      %s49 = sadd.s32 %s48, 1
      %s50 = scalar_select %p47, %s48, %s49
      %p53 = pneg %p47
      %p54 = scmp.eq.s32.totalorder %s15, 1
      %p55 = por %p53, %p54
      %p56 = scmp.ne.s32.totalorder %s48, %s51
      %p57 = scmp.eq.s32.totalorder %s15, 0
      %p58 = por %p56, %p57
      %p59 = scmp.ne.s32.totalorder %s48, %s51
      %p60 = scmp.eq.s32.totalorder %s20, 1
      %p61 = por %p59, %p60
      %p62 = scmp.ne.s32.totalorder %s51, %s52
      %p63 = scmp.eq.s32.totalorder %s20, 0
      %p64 = por %p62, %p63
      %p65 = scmp.ne.s32.totalorder %s51, %s52
      %p66 = scmp.eq.s32.totalorder %s21, 1
      %p67 = por %p65, %p66
      %p69 = scmp.ne.s32.totalorder %s52, %s68
      %p70 = scmp.eq.s32.totalorder %s21, 0
      %p71 = por %p69, %p70
      %s72 = ssub.s32 %s23, %s37
      %p73 = scmp.eq.s32.totalorder %s72, 0
      %s75 = sadd.s32 %s74, 1
      %s76 = scalar_select %p73, %s74, %s75
      %p79 = pneg %p73
      %p80 = scmp.eq.s32.totalorder %s15, 1
      %p81 = por %p79, %p80
      %p82 = scmp.ne.s32.totalorder %s74, %s77
      %p83 = scmp.eq.s32.totalorder %s15, 0
      %p84 = por %p82, %p83
      %p85 = scmp.ne.s32.totalorder %s74, %s77
      %p86 = scmp.eq.s32.totalorder %s20, 1
      %p87 = por %p85, %p86
      %p88 = scmp.ne.s32.totalorder %s77, %s78
      %p89 = scmp.eq.s32.totalorder %s20, 0
      %p90 = por %p88, %p89
      %p91 = scmp.ne.s32.totalorder %s77, %s78
      %p92 = scmp.eq.s32.totalorder %s21, 1
      %p93 = por %p91, %p92
      %p95 = scmp.ne.s32.totalorder %s78, %s94
      %p96 = scmp.eq.s32.totalorder %s21, 0
      %p97 = por %p95, %p96
      %s99 = sadd.s32 %s98, 1
      %p102 = scmp.eq.s32.totalorder %s15, 1
      %p103 = scmp.ne.s32.totalorder %s98, %s100
      %p104 = scmp.eq.s32.totalorder %s15, 0
      %p105 = por %p103, %p104
      %p106 = scmp.ne.s32.totalorder %s98, %s100
      %p107 = scmp.eq.s32.totalorder %s20, 1
      %p108 = por %p106, %p107
      %p109 = scmp.ne.s32.totalorder %s100, %s101
      %p110 = scmp.eq.s32.totalorder %s20, 0
      %p111 = por %p109, %p110
      %p112 = scmp.ne.s32.totalorder %s100, %s101
      %p113 = scmp.eq.s32.totalorder %s21, 1
      %p114 = por %p112, %p113
      %p116 = scmp.ne.s32.totalorder %s101, %s115
      %p117 = scmp.eq.s32.totalorder %s21, 0
      %p118 = por %p116, %p117
      %s119 = ssub.s32 %s22, %s41
      %p120 = scmp.eq.s32.totalorder %s119, 0
      %s122 = sadd.s32 %s121, 1
      %s123 = scalar_select %p120, %s121, %s122
      %p126 = pneg %p120
      %p127 = scmp.eq.s32.totalorder %s15, 1
      %p128 = por %p126, %p127
      %p129 = scmp.ne.s32.totalorder %s121, %s124
      %p130 = scmp.eq.s32.totalorder %s15, 0
      %p131 = por %p129, %p130
      %p132 = scmp.ne.s32.totalorder %s121, %s124
      %p133 = scmp.eq.s32.totalorder %s20, 1
      %p134 = por %p132, %p133
      %p135 = scmp.ne.s32.totalorder %s124, %s125
      %p136 = scmp.eq.s32.totalorder %s20, 0
      %p137 = por %p135, %p136
      %p138 = scmp.ne.s32.totalorder %s124, %s125
      %p139 = scmp.eq.s32.totalorder %s21, 1
      %p140 = por %p138, %p139
      %p142 = scmp.ne.s32.totalorder %s125, %s141
      %p143 = scmp.eq.s32.totalorder %s21, 0
      %p144 = por %p142, %p143
      %p145 = scmp.le.s32.totalorder 1, %s15
      %p146 = scmp.lt.s32.totalorder %s15, 3
      %p147 = pnand %p145, %p146
      %p148 = pneg %p147
      // Predicated region
      $region9: #{tpu_custom_call.1} parent=5 // pred_check
        _
      $region10: #{tpu_custom_call.1} parent=5 // pred_check_branch
        %150 = sbr.rel (%p147) target = $region12
      $region11: #{tpu_custom_call.1} parent=5 // pred_region
        %s151 = ssub.s32 %s15, 1
        // Predicated region
        $region13: #{tpu_custom_call.1} parent=11 // pred_check
          %p152 = pneg %p90
        $region14: #{tpu_custom_call.1} parent=11 // pred_check_branch
          %154 = sbr.rel (%p152) target = $region16
        $region15: #{tpu_custom_call.1} parent=11 // pred_region
          %p155 = scmp.lt.s32.totalorder %s26, 0
          %s156 = scalar_select %p155, %s26, 0
          %s157 = smul.addr %s156, 8
          %s158 = scalar_lea.vmem %s1, %s157
        $region16: #{tpu_custom_call.1} parent=11 // pred_fallthru
          _
        // Predicated region
        $region17: #{tpu_custom_call.1} parent=11 // pred_check
          %p159 = pneg %p111
        $region18: #{tpu_custom_call.1} parent=11 // pred_check_branch
          %161 = sbr.rel (%p159) target = $region20
        $region19: #{tpu_custom_call.1} parent=11 // pred_region
          _
        $region20: #{tpu_custom_call.1} parent=11 // pred_fallthru
          _
      $region12: #{tpu_custom_call.1} parent=5 // pred_fallthru
        _
      %p162 = scmp.lt.s32.totalorder %s15, 2
      // Predicated region
      $region21: #{tpu_custom_call.1} parent=5 // pred_check
        %p163 = pneg %p162
      $region22: #{tpu_custom_call.1} parent=5 // pred_check_branch
        %165 = sbr.rel (%p163) target = $region24
      $region23: #{tpu_custom_call.1} parent=5 // pred_region
        // Predicated region
        $region25: #{tpu_custom_call.1} parent=23 // pred_check
          %p166 = pneg %p58
        $region26: #{tpu_custom_call.1} parent=23 // pred_check_branch
          %168 = sbr.rel (%p166) target = $region28
        $region27: #{tpu_custom_call.1} parent=23 // pred_region
          %s169 = sand.u32 %s48, 1
          %s170 = scalar_lea.sflag [#allocation6], %s169
          %s171 = sand.u32 %s48, 1
          %s172 = smul.addr %s171, 16
          %s173 = scalar_lea.vmem [#allocation5], %s172
          %s174 = smul.u32 2, %s24
          %176 = vsyncadd %s170, 0
          %s177 = smul.addr %s23, 2
          %s178 = sadd.s32 %s174, %s177
          %s179 = smul.addr %s22, 2
          %s180 = sadd.s32 %s178, %s179
          %s181 = smul.addr %s180, 8
          %s182 = scalar_lea.hbm %s0, %s181
          %s184 = sshll.u32 %s182, 4
          %s185 = int_to_ptr.hbm [resolvable:$true] %s184
          %s186 = sshll.u32 %s173, 4
          %s187 = int_to_ptr.vmem [resolvable:$true] %s186
          %189 = dma.hbm_to_vmem [thread:$0]  %s185, 256, %s187, %s170
        $region28: #{tpu_custom_call.1} parent=23 // pred_fallthru
          _
      $region24: #{tpu_custom_call.1} parent=5 // pred_fallthru
        _
      %p190 = scmp.le.s32.totalorder 1, %s15
      %p191 = scmp.lt.s32.totalorder %s15, 3
      %p192 = pnand %p190, %p191
      %p193 = pneg %p192
      // Predicated region
      $region29: #{tpu_custom_call.1} parent=5 // pred_check
        _
      $region30: #{tpu_custom_call.1} parent=5 // pred_check_branch
        %195 = sbr.rel (%p192) target = $region32
      $region31: #{tpu_custom_call.1} parent=5 // pred_region
        %s196 = ssub.s32 %s15, 1
        %s197 = sand.u32 %s51, 1
        %s198 = scalar_lea.sflag [#allocation6], %s197
        %s199 = sand.u32 %s51, 1
        %s200 = smul.addr %s199, 16
        %s201 = scalar_lea.vmem [#allocation5], %s200
        // Predicated region
        $region33: #{tpu_custom_call.1} parent=31 // pred_check
          %p202 = pneg %p64
        $region34: #{tpu_custom_call.1} parent=31 // pred_check_branch
          %204 = sbr.rel (%p202) target = $region36
        $region35: #{tpu_custom_call.1} parent=31 // pred_region
          %206 = dma.done %s198, 256
        $region36: #{tpu_custom_call.1} parent=31 // pred_fallthru
          _
        %s207 = sand.u32 %s51, 1
        %s208 = scalar_lea.sflag [#allocation6], %s207
        %s209 = sand.u32 %s51, 1
        %s210 = smul.addr %s209, 16
        %s211 = scalar_lea.vmem [#allocation5], %s210
        %p212 = pneg %p64
        %p213 = pneg %p61
        %p214 = scmp.lt.s32.totalorder %s26, 0
        %s215 = scalar_select %p214, %s26, 0
        %s216 = smul.addr %s215, 8
        %s217 = scalar_lea.vmem %s1, %s216
        %p218 = pneg %p90
        %p219 = pneg %p87
        %p220 = pneg %p111
        %p221 = pneg %p108
        %p222 = pneg %p137
        %p223 = pneg %p134
        %s224 = sand.u32 %s124, 1
        %s225 = scalar_lea.sflag [#allocation7], %s224
        %s226 = sand.u32 %s124, 1
        %s227 = scalar_lea.vmem [#allocation8], %s226
        %s228 = smul.u32 2, %s27
        %p229 = scmp.lt.s32.totalorder %s26, 0
        %s230 = scalar_select %p229, %s26, 0
        %s231 = smul.addr %s230, 8
        %s232 = scalar_lea.vmem %s1, %s231
        %v233 = vld [vmem:[%s201] sm:$0xff]
        %v234 = vld [vmem:[%s201 + $0x8] sm:$0xff]
        %v235 = vadd.f32 %v233, %v234
        %236 = vadd.xlane.f32.xlu0 %v235
        %v237 = vpop.xlane.xlu0 %236
        %v238 = vmax.f32 %v233, %v234
        %239 = vmax.xlane.f32.xlu0 %v238
        %v240 = vpop.xlane.xlu0 %239
        %p241 = scmp.eq.s32.totalorder %s26, 0
        %p242 = scmp.eq.s32.totalorder %s27, 0
        %p243 = pnand %p241, %p242
        %p244 = pneg %p243
        // Predicated region
        $region37: #{tpu_custom_call.1} parent=31 // pred_check
          _
        $region38: #{tpu_custom_call.1} parent=31 // pred_check_branch
          %246 = sbr.rel (%p243) target = $region40
        $region39: #{tpu_custom_call.1} parent=31 // pred_region
          %vm247 = vcmask 9216
          %248 = vst.msk [vmem:[#allocation4] sm:$0x3] %vm247, 0.0
        $region40: #{tpu_custom_call.1} parent=31 // pred_fallthru
          _
        // Predicated region
        $region41: #{tpu_custom_call.1} parent=31 // pred_check
          %p249 = pneg %p242
        $region42: #{tpu_custom_call.1} parent=31 // pred_check_branch
          %251 = sbr.rel (%p249) target = $region44
        $region43: #{tpu_custom_call.1} parent=31 // pred_region
          %vm252 = vcmask 57344
          %253 = vst.msk [vmem:[#allocation2] sm:$0x1] %vm252, 0.0
          %254 = vst.msk [vmem:[#allocation3] sm:$0x1] %vm252, -inf
        $region44: #{tpu_custom_call.1} parent=31 // pred_fallthru
          _
        %v255 = vld [vmem:[#allocation2] sm:$0x1]
        %v257 = vperm.slane %v237, 0
        %v258 = vperm.slane %v237, 1
        %v259 = vperm.slane %v237, 2
        %v260 = vperm.slane %v237, 3
        %v261 = vperm.slane %v237, 4
        %v262 = vperm.slane %v237, 5
        %v263 = vperm.slane %v237, 6
        %v264 = vperm.slane %v237, 7
        %265 = vst [vmem:[#allocation1] ss:$9 sm:$0xff] %v257
        %s266 = scalar_lea.vmem [#allocation1], 1
        %267 = vst [vmem:[%s266] ss:$9 sm:$0xff] %v258
        %s268 = scalar_lea.vmem [#allocation1], 2
        %269 = vst [vmem:[%s268] ss:$9 sm:$0xff] %v259
        %s270 = scalar_lea.vmem [#allocation1], 3
        %271 = vst [vmem:[%s270] ss:$9 sm:$0xff] %v260
        %s272 = scalar_lea.vmem [#allocation1], 4
        %273 = vst [vmem:[%s272] ss:$9 sm:$0xff] %v261
        %s274 = scalar_lea.vmem [#allocation1], 5
        %275 = vst [vmem:[%s274] ss:$9 sm:$0xff] %v262
        %s276 = scalar_lea.vmem [#allocation1], 6
        %277 = vst [vmem:[%s276] ss:$9 sm:$0xff] %v263
        %s278 = scalar_lea.vmem [#allocation1], 7
        %279 = vst [vmem:[%s278] ss:$9 sm:$0xff] %v264
        %v280 = vld [vmem:[#allocation1] sm:$0xff]
        %281 = vset.pattern.permute.xlu0 0
        %282 = vperm.xlu0 %281, %v280
        %v283 = vpop.permute.xlu0 %282
        %v284 = vlaneseq
        %v285 = vand.u32 %v284, 127
        %v286 = vperm.slane %v283, %v285
        %v288 = vadd.f32 %v255, %v286
        %vm289 = vcmask 57344
        %290 = vst.msk [vmem:[#allocation2] sm:$0x1] %vm289, %v288
        %v291 = vld [vmem:[#allocation3] sm:$0x1]
        %v293 = vperm.slane %v240, 0
        %v294 = vperm.slane %v240, 1
        %v295 = vperm.slane %v240, 2
        %v296 = vperm.slane %v240, 3
        %v297 = vperm.slane %v240, 4
        %v298 = vperm.slane %v240, 5
        %v299 = vperm.slane %v240, 6
        %v300 = vperm.slane %v240, 7
        %301 = vst [vmem:[#allocation1] ss:$9 sm:$0xff] %v293
        %s302 = scalar_lea.vmem [#allocation1], 1
        %303 = vst [vmem:[%s302] ss:$9 sm:$0xff] %v294
        %s304 = scalar_lea.vmem [#allocation1], 2
        %305 = vst [vmem:[%s304] ss:$9 sm:$0xff] %v295
        %s306 = scalar_lea.vmem [#allocation1], 3
        %307 = vst [vmem:[%s306] ss:$9 sm:$0xff] %v296
        %s308 = scalar_lea.vmem [#allocation1], 4
        %309 = vst [vmem:[%s308] ss:$9 sm:$0xff] %v297
        %s310 = scalar_lea.vmem [#allocation1], 5
        %311 = vst [vmem:[%s310] ss:$9 sm:$0xff] %v298
        %s312 = scalar_lea.vmem [#allocation1], 6
        %313 = vst [vmem:[%s312] ss:$9 sm:$0xff] %v299
        %s314 = scalar_lea.vmem [#allocation1], 7
        %315 = vst [vmem:[%s314] ss:$9 sm:$0xff] %v300
        %v316 = vld [vmem:[#allocation1] sm:$0xff]
        %317 = vset.pattern.permute.xlu0 0
        %318 = vperm.xlu0 %317, %v316
        %v319 = vpop.permute.xlu0 %318
        %v320 = vperm.slane %v319, %v285
        %v322 = vmax.f32 %v291, %v320
        %323 = vst.msk [vmem:[#allocation3] sm:$0x1] %vm289, %v322
        // Predicated region
        $region45: #{tpu_custom_call.1} parent=31 // pred_check
          %p324 = pneg %p242
        $region46: #{tpu_custom_call.1} parent=31 // pred_check_branch
          %326 = sbr.rel (%p324) target = $region48
        $region47: #{tpu_custom_call.1} parent=31 // pred_region
          %v327 = vld [vmem:[#allocation2] sm:$0x1]
          %v328 = vmul.f32 %v327, 0.00390625
          %v329 = vld [vmem:[#allocation3] sm:$0x1]
          %v331 = vperm.slane %v329, 0
          %vm333 = vcmask 1040384
          %v334 = vsel %vm333, %v328, %v331
          %v335 = vld [vmem:[#allocation4] sm:$0x3]
          %v336 = vld [vmem:[%s232] sm:$0xff]
          %vm337 = vcmask 64512
          %v339 = vsel %vm337, %v334, 0
          %341 = vmatpush.msra.mxu0 0.0
          %342 = vmatpush.msra.mxu0 0.0
          %343 = vmatpush.msra.mxu0 0.0
          %344 = vmatpush.msra.mxu0 0.0
          %345 = vmatpush.msra.mxu0 0.0
          %346 = vmatpush.msra.mxu0 0.0
          %347 = vmatpush.msra.mxu0 0.0
          %348 = vmatpush.msra.mxu0 0.0
          %349 = vmatpush.msra.mxu0 0.0
          %350 = vmatpush.msra.mxu0 0.0
          %351 = vmatpush.msra.mxu0 0.0
          %352 = vmatpush.msra.mxu0 0.0
          %353 = vmatpush.msra.mxu0 0.0
          %354 = vmatpush.msra.mxu0 0.0
          %355 = vmatpush.msra.mxu0 0.0
          %356 = vmatpush.msra.mxu0 %v336
          %357 = vmatmul.f32.gmra.mxu0 %v339
          %v358 = vpop.f32.mrf.mxu0
          %v359 = vadd.f32 0.0, %v358
          %360 = vdwg.mxu0
          %v361 = vadd.f32 %v335, %v359
          %vm362 = vcmask 9216
          %363 = vst.msk [vmem:[#allocation4] sm:$0x3] %vm362, %v361
        $region48: #{tpu_custom_call.1} parent=31 // pred_fallthru
          _
        // Predicated region
        $region49: #{tpu_custom_call.1} parent=31 // pred_check
          _
        $region50: #{tpu_custom_call.1} parent=31 // pred_check_branch
          %365 = sbr.rel (%p243) target = $region52
        $region51: #{tpu_custom_call.1} parent=31 // pred_region
          %v366 = vld [vmem:[#allocation4] sm:$0x3]
          %v367 = vmax.f32 %v366, 0.0
          %v369 = vrot.slane %v367, 1
          %v371 = vadd.f32 %v367, %v369
          %v372 = vld [vmem:[%s2] sm:$0x3]
          %vm373 = vcmask 15360
          %v375 = vsel %vm373, %v371, 0
          %vm377 = vcmask 1041408
          %v379 = vsel %vm377, %v372, 0
          %381 = vmatpush.msra.mxu0 0.0
          %382 = vmatpush.msra.mxu0 0.0
          %383 = vmatpush.msra.mxu0 0.0
          %384 = vmatpush.msra.mxu0 0.0
          %385 = vmatpush.msra.mxu0 0.0
          %386 = vmatpush.msra.mxu0 0.0
          %387 = vmatpush.msra.mxu0 0.0
          %388 = vmatpush.msra.mxu0 0.0
          %389 = vmatpush.msra.mxu0 0.0
          %390 = vmatpush.msra.mxu0 0.0
          %391 = vmatpush.msra.mxu0 0.0
          %392 = vmatpush.msra.mxu0 0.0
          %393 = vmatpush.msra.mxu0 0.0
          %394 = vmatpush.msra.mxu0 0.0
          %395 = vmatpush.msra.mxu0 0.0
          %396 = vmatpush.msra.mxu0 %v379
          %397 = vmatmul.f32.gmra.mxu0 %v375
          %v398 = vpop.f32.mrf.mxu0
          %v399 = vadd.f32 0.0, %v398
          %400 = vdwg.mxu0
          %v401 = vxor.u32 %v399, 2147483648
          %v402 = vmul.f32 %v401, 1.442695
          %v403 = vpow.pop %v402
          %v404 = vadd.f32 %v403, 1.0
          %v405 = vrcp.pop %v404
          %v406 = vmul.f32 %v404, %v405
          %v407 = vsub.f32 1.0, %v406
          %v408 = vmul.f32 %v405, %v407
          %v409 = vadd.f32 %v405, %v408
          %vm410 = vweird.f32 %v404
          %vm411 = vweird.f32 %v405
          %vm412 = vmor %vm410, %vm411
          %v413 = vsel %vm412, %v405, %v409
          %v414 = vand.u32 2147483647, %v404
          %vm415 = vcmp.eq.f32.partialorder %v414, 8.507059e+37
          %v416 = vand.u32 %v404, 2147483648
          %v417 = vor.u32 1.1754944e-38, %v416
          %v418 = vsel %vm415, %v417, %v413
          %v419 = vmul.f32 1.0, %v418
          %420 = vst.msk [vmem:[%s227] sm:$0x1] %vm289, %v419
        $region52: #{tpu_custom_call.1} parent=31 // pred_fallthru
          _
        %s421 = sand.u32 %s124, 1
        %s422 = scalar_lea.sflag [#allocation7], %s421
        %s423 = sand.u32 %s124, 1
        %s424 = scalar_lea.vmem [#allocation8], %s423
        // Predicated region
        $region53: #{tpu_custom_call.1} parent=31 // pred_check
          %p425 = pneg %p134
        $region54: #{tpu_custom_call.1} parent=31 // pred_check_branch
          %427 = sbr.rel (%p425) target = $region56
        $region55: #{tpu_custom_call.1} parent=31 // pred_region
          %429 = vsyncadd %s422, 0
          %s430 = scalar_lea.hbm %s3, %s25
          %s432 = sshll.u32 %s424, 4
          %s433 = int_to_ptr.vmem [resolvable:$true] %s432
          %s434 = sshll.u32 %s430, 4
          %s435 = int_to_ptr.hbm [resolvable:$true] %s434
          %437 = dma.vmem_to_hbm [thread:$0]  %s433, 16, %s435, %s422
        $region56: #{tpu_custom_call.1} parent=31 // pred_fallthru
          _
      $region32: #{tpu_custom_call.1} parent=5 // pred_fallthru
        _
      %p438 = scmp.le.s32.totalorder 2, %s15
      // Predicated region
      $region57: #{tpu_custom_call.1} parent=5 // pred_check
        %p439 = pneg %p438
      $region58: #{tpu_custom_call.1} parent=5 // pred_check_branch
        %441 = sbr.rel (%p439) target = $region60
      $region59: #{tpu_custom_call.1} parent=5 // pred_region
        %s442 = ssub.s32 %s15, 2
        // Predicated region
        $region61: #{tpu_custom_call.1} parent=59 // pred_check
          %p443 = pneg %p140
        $region62: #{tpu_custom_call.1} parent=59 // pred_check_branch
          %445 = sbr.rel (%p443) target = $region64
        $region63: #{tpu_custom_call.1} parent=59 // pred_region
          %s446 = sand.u32 %s125, 1
          %s447 = scalar_lea.sflag [#allocation7], %s446
          %s448 = sand.u32 %s125, 1
          %s449 = scalar_lea.vmem [#allocation8], %s448
          %451 = dma.done %s447, 16
        $region64: #{tpu_custom_call.1} parent=59 // pred_fallthru
          _
      $region60: #{tpu_custom_call.1} parent=5 // pred_fallthru
        _
    $region6: #{tpu_custom_call.1} parent=1 // loop_footer
      %s19 = sadd.s32 1, %s15
    $region7: #{tpu_custom_call.1} parent=1 // loop_footer_branch
      %14 = sbr.rel target = $region3
    $region8: #{tpu_custom_call.1} parent=1 // loop_exit
      _
    %452 = vsyncpa [#allocation6], 1
    %s453 = scalar_lea.sflag [#allocation6], 1
    %454 = vsyncpa %s453, 1
    %455 = vsyncpa [#allocation7], 1
    %s456 = scalar_lea.sflag [#allocation7], 1
    %457 = vsyncpa %s456, 1

</llo_original>
